<compile_context>
chip_gen: v5e
topology: v5e:2x2
jax: 0.10.0
libtpu: 0.0.40
codegen_flags: <defaults>
</compile_context>

<pallas_src>
import functools

import jax
import jax.numpy as jnp
from jax.experimental import pallas as pl
from jax.experimental.pallas import tpu as pltpu

_LANE = 128
_SUBLANE = 8
_NEG_SLOPE = 0.01  # F.leaky_relu default negative_slope


def _round_up(x, m):
    return (x + m - 1) // m * m


def _fused_mlp_kernel(x_ref, *refs, n_layers):
    """One batch tile of the fused MLP.

    refs = (w0, b0, w1, b1, ..., o_ref).  Static Python loop over the small,
    fixed layer count; the running activation never leaves vregs/VMEM.
    """
    o_ref = refs[-1]
    wb = refs[:-1]

    act = x_ref[...]
    for li in range(n_layers):
        w = wb[2 * li][...]
        b = wb[2 * li + 1][...]
        # MXU matmul with f32 accumulation; bias + leaky_relu on the VPU in f32.
        acc = jnp.dot(act.astype(w.dtype), w, preferred_element_type=jnp.float32)
        acc = acc + b.astype(jnp.float32)
        if li != n_layers - 1:
            # leaky_relu(x) = max(x, slope*x) for slope in [0,1]: one VPU op.
            acc = jnp.maximum(acc, _NEG_SLOPE * acc)
        act = acc
    o_ref[...] = act.astype(o_ref.dtype)


def _vmem_limit_bytes():
    """Generation-aware VMEM ceiling with headroom for compiler scratch."""
    try:
        cap = int(pltpu.get_tpu_info().vmem_capacity_bytes)
    except Exception:
        cap = 64 * 1024 * 1024  # conservative (v7x physical per-TC)
    # ~12.5% (>=8 MiB) headroom: 64 MiB -> 56 MiB (v7x), 128 MiB -> 112 MiB.
    return cap - max(8 * 1024 * 1024, cap // 8)


def _auto_compute_dtype():
    """bf16 operands on v6e/v7x (native MXU rate, half the DMA bytes)."""
    try:
        kind = jax.devices()[0].device_kind.lower()
    except Exception:
        return jnp.float32
    if ("v6" in kind) or ("v7" in kind):
        return jnp.bfloat16
    return jnp.float32


def fully_connected_forward(x, params, *, tm_max=512, compute_dtype=None,
                            out_dtype=None):
    """Mirrors FullyConnected.forward.

    x:      (M, dims[0]) float32
    params: list of (W, b) with W (in_features, out_features) — i.e. PyTorch's
            Linear weight already transposed — and b (out_features,).
    compute_dtype: None -> auto (bf16 on v6e/v7x, f32 otherwise);
            jnp.float32 gives the exact path. Accumulation / bias / leaky_relu
            stay f32 regardless.
    out_dtype: dtype of the kernel output (defaults to x.dtype).
    """
    M, K0 = x.shape
    n_layers = len(params)

    if compute_dtype is None:
        compute_dtype = _auto_compute_dtype()
    compute_dtype = jnp.dtype(compute_dtype)
    if out_dtype is None:
        out_dtype = x.dtype
    out_dtype = jnp.dtype(out_dtype)

    dims = [K0] + [w.shape[1] for (w, _) in params]
    dims_p = [_round_up(d, _LANE) for d in dims]

    # Sublane packing: 8 rows for f32 tiles, 16 for bf16.
    sub = _SUBLANE * (4 // compute_dtype.itemsize)

    vmem_budget = _vmem_limit_bytes()

    def vmem_bytes(tm):
        # Single-buffered resident weights/biases + 3-deep streamed x/out tiles
        # + f32 working activations.
        w_res = sum(dims_p[li] * dims_p[li + 1]
                    for li in range(n_layers)) * compute_dtype.itemsize
        b_res = sum(dims_p[1:]) * 4
        x_tile = 3 * tm * dims_p[0] * compute_dtype.itemsize
        o_tile = 3 * tm * dims_p[-1] * out_dtype.itemsize
        act = 2 * tm * max(dims_p) * 4
        return w_res + b_res + x_tile + o_tile + act

    # Balanced batch tiling: smallest tile count that respects tm_max, but at
    # least 2 tiles (so "parallel" shards across v7x's 2 TensorCores) whenever
    # the batch allows it; tile shrinks further only if VMEM demands it.
    m8 = _round_up(M, sub)
    n_tiles = pl.cdiv(m8, tm_max)
    if n_tiles < 2 and m8 > sub:
        n_tiles = 2
    tm = _round_up(pl.cdiv(m8, n_tiles), sub)
    while vmem_bytes(tm) > vmem_budget and tm > sub:
        tm = _round_up(max(tm // 2, sub), sub)
    if vmem_bytes(tm) > vmem_budget:
        # TODO(synk): fall back to tiling the widest layer's N with an extra
        # "arbitrary" grid axis + f32 accumulator scratch instead of keeping
        # every weight fully VMEM-resident.
        raise ValueError(
            "FullyConnected weight stack does not fit VMEM with fully "
            "resident weights; N-tiled fallback not implemented.")
    n_tiles = pl.cdiv(m8, tm)
    m_pad = tm * n_tiles

    # Glue layout work in plain JAX: lane-dense zero padding (exact: padded K
    # rows of W are zero, padded N columns carry 0 through bias + leaky_relu).
    x_p = jnp.pad(x, ((0, m_pad - M), (0, dims_p[0] - K0))).astype(compute_dtype)

    flat_wb = []
    for li, (w, b) in enumerate(params):
        kin, kout = w.shape
        w_p = jnp.pad(w.astype(compute_dtype),
                      ((0, dims_p[li] - kin), (0, dims_p[li + 1] - kout)))
        b_p = jnp.pad(b.reshape(1, kout).astype(jnp.float32),
                      ((0, 0), (0, dims_p[li + 1] - kout)))
        flat_wb += [w_p, b_p]

    flops = 2 * m_pad * sum(dims_p[li] * dims_p[li + 1]
                            for li in range(n_layers))
    bytes_accessed = (
        x_p.size * x_p.dtype.itemsize
        + sum(a.size * a.dtype.itemsize for a in flat_wb)
        + m_pad * dims_p[-1] * out_dtype.itemsize)

    def run(use_buffer_hints):
        if use_buffer_hints:
            stream_mode = dict(pipeline_mode=pl.Buffered(3))  # hide DMA latency
            const_mode = dict(pipeline_mode=pl.Buffered(1))   # no double-buffer
        else:
            stream_mode = {}
            const_mode = {}

        in_specs = [pl.BlockSpec((tm, dims_p[0]), lambda i: (i, 0),
                                 **stream_mode)]
        for li in range(n_layers):
            # Full (untiled) weight / bias blocks: constant index_map keeps
            # them VMEM-resident across the batch grid (no re-fetch per tile).
            in_specs.append(pl.BlockSpec((dims_p[li], dims_p[li + 1]),
                                         lambda i: (0, 0), **const_mode))
            in_specs.append(pl.BlockSpec((1, dims_p[li + 1]),
                                         lambda i: (0, 0), **const_mode))
        out_specs = pl.BlockSpec((tm, dims_p[-1]), lambda i: (i, 0),
                                 **stream_mode)

        return pl.pallas_call(
            functools.partial(_fused_mlp_kernel, n_layers=n_layers),
            out_shape=jax.ShapeDtypeStruct((m_pad, dims_p[-1]), out_dtype),
            grid_spec=pltpu.PrefetchScalarGridSpec(
                num_scalar_prefetch=0,
                grid=(n_tiles,),
                in_specs=in_specs,
                out_specs=out_specs,
            ),
            compiler_params=pltpu.CompilerParams(
                dimension_semantics=("parallel",),   # batch tiles across TCs
                vmem_limit_bytes=int(vmem_budget),
            ),
            cost_estimate=pl.CostEstimate(
                flops=flops, transcendentals=0, bytes_accessed=bytes_accessed),
        )(x_p, *flat_wb)

    try:
        out_p = run(True)
    except Exception:
        # Older jax without BlockSpec pipeline_mode hints (or hint rejected):
        # identical math, default buffering.
        out_p = run(False)

    return out_p[:M, :dims[-1]]


def init_params(key, dims, layers):
    """Deterministic init mimicking nn.Linear: W (out,in) ~ U(-1/sqrt(in), .),
    stored pre-transposed as (in, out) plus bias (out,)."""
    params = []
    for layer in range(layers):
        in_f, out_f = dims[layer], dims[layer + 1]
        key, kw, kb = jax.random.split(key, 3)
        bound = 1.0 / (in_f ** 0.5)
        w = jax.random.uniform(kw, (out_f, in_f), jnp.float32, -bound, bound)
        b = jax.random.uniform(kb, (out_f,), jnp.float32, -bound, bound)
        params.append((w.T, b))
    return params


def reference_forward(x, params):
    out = x
    for li, (w, b) in enumerate(params):
        out = out @ w + b
        if li != len(params) - 1:
            out = jnp.where(out >= 0, out, _NEG_SLOPE * out)
    return out


if __name__ == "__main__":
    key = jax.random.PRNGKey(0)
    dims = [32, 64, 16]          # FullyConnected(dims=[32, 64, 16], layers=2)
    layers = 2
    batch = 8

    key, kx = jax.random.split(key)
    x = jax.random.normal(kx, (batch, dims[0]), jnp.float32)
    params = init_params(key, dims, layers)

    ref = reference_forward(x, params)

    # Exact path (f32 operands everywhere).
    out = jax.block_until_ready(
        fully_connected_forward(x, params, compute_dtype=jnp.float32))
    assert out.shape == (batch, dims[-1])
    assert jnp.allclose(out, ref, atol=1e-5, rtol=1e-5)

    # Auto path: bf16 operands on v6e/v7x (f32 accumulation), f32 elsewhere.
    out_auto = jax.block_until_ready(fully_connected_forward(x, params))
    assert jnp.allclose(out_auto, ref, atol=3e-2, rtol=3e-2)

    # Explicit bf16-MXU path (exercises bf16 sublane packing on any chip).
    out_bf16 = jax.block_until_ready(
        fully_connected_forward(x, params, compute_dtype=jnp.bfloat16))
    assert jnp.allclose(out_bf16, ref, atol=3e-2, rtol=3e-2)

    print("KERNEL_OK")
</pallas_src>

<mosaic_0001>
module attributes {stable_mosaic.version = 11 : i64} {
  func.func @_fused_mlp_kernel(%arg0: i32, %arg1: memref<8x128xf32, #tpu.memory_space<vmem>>, %arg2: memref<128x128xf32, #tpu.memory_space<vmem>>, %arg3: memref<1x128xf32, #tpu.memory_space<vmem>>, %arg4: memref<128x128xf32, #tpu.memory_space<vmem>>, %arg5: memref<1x128xf32, #tpu.memory_space<vmem>>, %arg6: memref<8x128xf32, #tpu.memory_space<vmem>>) attributes {dimension_semantics = [#tpu.dimension_semantics<parallel>], iteration_bounds = array<i64: 1>, scalar_prefetch = 0 : i64, scratch_operands = 0 : i64, tpu.core_type = #tpu.core_type<tc>, window_params = [{transform_indices = @transform_0, window_bounds = array<i64: 8, 128>}, {pipeline_mode = #tpu.pipeline_mode<synchronous>, transform_indices = @transform_1, window_bounds = array<i64: 128, 128>}, {pipeline_mode = #tpu.pipeline_mode<synchronous>, transform_indices = @transform_2, window_bounds = array<i64: 1, 128>}, {pipeline_mode = #tpu.pipeline_mode<synchronous>, transform_indices = @transform_3, window_bounds = array<i64: 128, 128>}, {pipeline_mode = #tpu.pipeline_mode<synchronous>, transform_indices = @transform_4, window_bounds = array<i64: 1, 128>}, {transform_indices = @transform_5, window_bounds = array<i64: 8, 128>}]} {
    %c0 = arith.constant 0 : index
    %c0_0 = arith.constant 0 : index
    %0 = vector.load %arg1[%c0, %c0_0] : memref<8x128xf32, #tpu.memory_space<vmem>>, vector<8x128xf32>
    %c0_1 = arith.constant 0 : index
    %c0_2 = arith.constant 0 : index
    %1 = vector.load %arg2[%c0_1, %c0_2] : memref<128x128xf32, #tpu.memory_space<vmem>>, vector<128x128xf32>
    %c0_3 = arith.constant 0 : index
    %c0_4 = arith.constant 0 : index
    %2 = vector.load %arg3[%c0_3, %c0_4] : memref<1x128xf32, #tpu.memory_space<vmem>>, vector<1x128xf32>
    %cst = arith.constant dense<0.000000e+00> : vector<8x128xf32>
    %3 = tpu.matmul %0, %1, %cst {dimension_numbers = #tpu.dot_dimension_numbers<[1], [0], [0], [1], [0, 0, 1, 1], [], []>} : vector<8x128xf32>, vector<128x128xf32>, vector<8x128xf32> -> vector<8x128xf32>
    %4 = vector.broadcast %2 : vector<1x128xf32> to vector<8x128xf32>
    %5 = arith.addf %3, %4 : vector<8x128xf32>
    %cst_5 = arith.constant 0.00999999977 : f32
    %6 = vector.broadcast %cst_5 : f32 to vector<8x128xf32>
    %7 = arith.mulf %6, %5 : vector<8x128xf32>
    %8 = arith.maximumf %5, %7 : vector<8x128xf32>
    %c0_6 = arith.constant 0 : index
    %c0_7 = arith.constant 0 : index
    %9 = vector.load %arg4[%c0_6, %c0_7] : memref<128x128xf32, #tpu.memory_space<vmem>>, vector<128x128xf32>
    %c0_8 = arith.constant 0 : index
    %c0_9 = arith.constant 0 : index
    %10 = vector.load %arg5[%c0_8, %c0_9] : memref<1x128xf32, #tpu.memory_space<vmem>>, vector<1x128xf32>
    %cst_10 = arith.constant dense<0.000000e+00> : vector<8x128xf32>
    %11 = tpu.matmul %8, %9, %cst_10 {dimension_numbers = #tpu.dot_dimension_numbers<[1], [0], [0], [1], [0, 0, 1, 1], [], []>} : vector<8x128xf32>, vector<128x128xf32>, vector<8x128xf32> -> vector<8x128xf32>
    %12 = vector.broadcast %10 : vector<1x128xf32> to vector<8x128xf32>
    %13 = arith.addf %11, %12 : vector<8x128xf32>
    %c0_11 = arith.constant 0 : index
    %c0_12 = arith.constant 0 : index
    %14 = vector.load %arg6[%c0_11, %c0_12] : memref<8x128xf32, #tpu.memory_space<vmem>>, vector<8x128xf32>
    tpu.vector_store %arg6[%c0_11, %c0_12], %13 {strides = array<i32>} : memref<8x128xf32, #tpu.memory_space<vmem>>, vector<8x128xf32>,
    return
  }
  func.func @transform_0(%arg0: i32) -> (i32, i32) {
    %c0_i32 = arith.constant 0 : i32
    %c0_i32_0 = arith.constant 0 : i32
    return %arg0, %c0_i32 : i32, i32
  }
  func.func @transform_1(%arg0: i32) -> (i32, i32) {
    %c0_i32 = arith.constant 0 : i32
    %c0_i32_0 = arith.constant 0 : i32
    %c0_i32_1 = arith.constant 0 : i32
    return %c0_i32, %c0_i32_0 : i32, i32
  }
  func.func @transform_2(%arg0: i32) -> (i32, i32) {
    %c0_i32 = arith.constant 0 : i32
    %c0_i32_0 = arith.constant 0 : i32
    %c0_i32_1 = arith.constant 0 : i32
    return %c0_i32, %c0_i32_0 : i32, i32
  }
  func.func @transform_3(%arg0: i32) -> (i32, i32) {
    %c0_i32 = arith.constant 0 : i32
    %c0_i32_0 = arith.constant 0 : i32
    %c0_i32_1 = arith.constant 0 : i32
    return %c0_i32, %c0_i32_0 : i32, i32
  }
  func.func @transform_4(%arg0: i32) -> (i32, i32) {
    %c0_i32 = arith.constant 0 : i32
    %c0_i32_0 = arith.constant 0 : i32
    %c0_i32_1 = arith.constant 0 : i32
    return %c0_i32, %c0_i32_0 : i32, i32
  }
  func.func @transform_5(%arg0: i32) -> (i32, i32) {
    %c0_i32 = arith.constant 0 : i32
    %c0_i32_0 = arith.constant 0 : i32
    return %arg0, %c0_i32 : i32, i32
  }
}

</mosaic_0001>

<llo_original>
// kernel: tpu_custom_call.1
$region0: #{tpu_custom_call.1}
  #allocation0 [shape = 'u32[]', space=smem, size = 0x4, offset = 0x4, fixed_abs, tag = 'smem constant byte address 0x4 - core index']
  #allocation1 [shape = 'u32[72,128]{1,0:T(1,128)}', space=vmem, size = 0x9000, scoped, tag = 'internal scratch']
  %s0 = inlined_call_operand.hbm [shape: f32[8,128], index: 0, kind: input, shape index: {}]
  %s1 = inlined_call_operand.hbm [shape: f32[128,128], index: 1, kind: input, shape index: {}]
  %s2 = inlined_call_operand.vmem [shape: f32[1,128], index: 2, kind: input, shape index: {}]
  %s3 = inlined_call_operand.hbm [shape: f32[128,128], index: 3, kind: input, shape index: {}]
  %s4 = inlined_call_operand.vmem [shape: f32[1,128], index: 4, kind: input, shape index: {}]
  %s5 = inlined_call_operand.hbm [shape: f32[8,128], index: 5, kind: output, shape index: {}]
  %s6 = sld [smem:[#allocation0]]
  $region42: #{tpu_custom_call.1} parent=0
    _
  %s8 = ssub.s32 1, %s6
  %s9 = scalar_select 0, %s8, %s6
  $region1: #{tpu_custom_call.1} parent=0
    #allocation2 [shape = 'u8[4096]{0}', space=vmem, size = 0x1000, scoped, tag = 'input window, operand 0, single buffered']
    #allocation3 [shape = 's32[1]{0}', space=sflag, size = 0x4, scoped, tag = 'scoped memory for tpu_custom_call.1']
    #allocation4 [shape = 's32[1]{0}', space=sflag, size = 0x4, scoped, tag = 'scoped memory for tpu_custom_call.1']
    #allocation5 [shape = 'u8[65536]{0}', space=vmem, size = 0x10000, scoped, tag = 'input window, operand 1, single buffered']
    #allocation6 [shape = 's32[1]{0}', space=sflag, size = 0x4, scoped, tag = 'scoped memory for tpu_custom_call.1']
    #allocation7 [shape = 'u8[65536]{0}', space=vmem, size = 0x10000, scoped, tag = 'input window, operand 3, single buffered']
    #allocation8 [shape = 'u8[4096]{0}', space=vmem, size = 0x1000, scoped, tag = 'output window, operand 0, single buffered']
    %10 = vsyncpa [#allocation3], 0
    %11 = vsyncpa [#allocation6], 0
    %12 = vsyncpa [#allocation4], 0
    // Predicated region
    $region2: #{tpu_custom_call.1} parent=1 // pred_check
      _
    $region3: #{tpu_custom_call.1} parent=1 // pred_check_branch
      %14 = sbr.rel (0) target = $region5
    $region4: #{tpu_custom_call.1} parent=1 // pred_region
      %16 = vsyncadd [#allocation3], 0
      %s18 = sshll.u32 %s0, 4
      %s19 = int_to_ptr.hbm [resolvable:$true] %s18
      %s20 = sshll.u32 [#allocation2], 4
      %s21 = int_to_ptr.vmem [resolvable:$true] %s20
      %23 = dma.hbm_to_vmem [thread:$0]  %s19, 128, %s21, [#allocation3]
    $region5: #{tpu_custom_call.1} parent=1 // pred_fallthru
      _
    // Predicated region
    $region6: #{tpu_custom_call.1} parent=1 // pred_check
      _
    $region7: #{tpu_custom_call.1} parent=1 // pred_check_branch
      %25 = sbr.rel (0) target = $region9
    $region8: #{tpu_custom_call.1} parent=1 // pred_region
      %27 = vsyncadd [#allocation6], 0
      %s28 = sshll.u32 %s1, 4
      %s29 = int_to_ptr.hbm [resolvable:$true] %s28
      %s30 = sshll.u32 [#allocation5], 4
      %s31 = int_to_ptr.vmem [resolvable:$true] %s30
      %36 = dma.hbm_to_vmem [thread:$0]  %s29, 2048, %s31, [#allocation6], 128, 128, 8
    $region9: #{tpu_custom_call.1} parent=1 // pred_fallthru
      _
    // Predicated region
    $region10: #{tpu_custom_call.1} parent=1 // pred_check
      _
    $region11: #{tpu_custom_call.1} parent=1 // pred_check_branch
      %38 = sbr.rel (0) target = $region13
    $region12: #{tpu_custom_call.1} parent=1 // pred_region
      _
    $region13: #{tpu_custom_call.1} parent=1 // pred_fallthru
      _
    // Predicated region
    $region14: #{tpu_custom_call.1} parent=1 // pred_check
      _
    $region15: #{tpu_custom_call.1} parent=1 // pred_check_branch
      %40 = sbr.rel (0) target = $region17
    $region16: #{tpu_custom_call.1} parent=1 // pred_region
      %42 = vsyncadd [#allocation6], 0
      %s43 = sshll.u32 %s3, 4
      %s44 = int_to_ptr.hbm [resolvable:$true] %s43
      %s45 = sshll.u32 [#allocation7], 4
      %s46 = int_to_ptr.vmem [resolvable:$true] %s45
      %51 = dma.hbm_to_vmem [thread:$0]  %s44, 2048, %s46, [#allocation6], 128, 128, 8
    $region17: #{tpu_custom_call.1} parent=1 // pred_fallthru
      _
    // Predicated region
    $region18: #{tpu_custom_call.1} parent=1 // pred_check
      _
    $region19: #{tpu_custom_call.1} parent=1 // pred_check_branch
      %53 = sbr.rel (0) target = $region21
    $region20: #{tpu_custom_call.1} parent=1 // pred_region
      _
    $region21: #{tpu_custom_call.1} parent=1 // pred_fallthru
      _
    // Predicated region
    $region22: #{tpu_custom_call.1} parent=1 // pred_check
      _
    $region23: #{tpu_custom_call.1} parent=1 // pred_check_branch
      %55 = sbr.rel (0) target = $region25
    $region24: #{tpu_custom_call.1} parent=1 // pred_region
      %57 = dma.done [#allocation3], 128
    $region25: #{tpu_custom_call.1} parent=1 // pred_fallthru
      _
    // Predicated region
    $region26: #{tpu_custom_call.1} parent=1 // pred_check
      _
    $region27: #{tpu_custom_call.1} parent=1 // pred_check_branch
      %59 = sbr.rel (0) target = $region29
    $region28: #{tpu_custom_call.1} parent=1 // pred_region
      %61 = dma.done [#allocation6], 2048
    $region29: #{tpu_custom_call.1} parent=1 // pred_fallthru
      _
    // Predicated region
    $region30: #{tpu_custom_call.1} parent=1 // pred_check
      _
    $region31: #{tpu_custom_call.1} parent=1 // pred_check_branch
      %63 = sbr.rel (0) target = $region33
    $region32: #{tpu_custom_call.1} parent=1 // pred_region
      %65 = dma.done [#allocation6], 2048
    $region33: #{tpu_custom_call.1} parent=1 // pred_fallthru
      _
    %v66 = vld [vmem:[#allocation2] sm:$0xff]
    %v67 = vld [vmem:[#allocation5] sm:$0xff]
    %v68 = vld [vmem:[#allocation5 + $0x8] sm:$0xff]
    %v69 = vld [vmem:[#allocation5 + $0x10] sm:$0xff]
    %v70 = vld [vmem:[#allocation5 + $0x18] sm:$0xff]
    %v71 = vld [vmem:[#allocation5 + $0x20] sm:$0xff]
    %v72 = vld [vmem:[#allocation5 + $0x28] sm:$0xff]
    %v73 = vld [vmem:[#allocation5 + $0x30] sm:$0xff]
    %v74 = vld [vmem:[#allocation5 + $0x38] sm:$0xff]
    %v75 = vld [vmem:[#allocation5 + $0x40] sm:$0xff]
    %v76 = vld [vmem:[#allocation5 + $0x48] sm:$0xff]
    %v77 = vld [vmem:[#allocation5 + $0x50] sm:$0xff]
    %v78 = vld [vmem:[#allocation5 + $0x58] sm:$0xff]
    %v79 = vld [vmem:[#allocation5 + $0x60] sm:$0xff]
    %v80 = vld [vmem:[#allocation5 + $0x68] sm:$0xff]
    %v81 = vld [vmem:[#allocation5 + $0x70] sm:$0xff]
    %v82 = vld [vmem:[#allocation5 + $0x78] sm:$0xff]
    %v83 = vld [vmem:[%s2] sm:$0x1]
    %v85 = vperm.slane %v83, 0
    %87 = vmatpush.msra.mxu0 %v82
    %88 = vmatpush.msra.mxu0 %v81
    %89 = vmatpush.msra.mxu0 %v80
    %90 = vmatpush.msra.mxu0 %v79
    %91 = vmatpush.msra.mxu0 %v78
    %92 = vmatpush.msra.mxu0 %v77
    %93 = vmatpush.msra.mxu0 %v76
    %94 = vmatpush.msra.mxu0 %v75
    %95 = vmatpush.msra.mxu0 %v74
    %96 = vmatpush.msra.mxu0 %v73
    %97 = vmatpush.msra.mxu0 %v72
    %98 = vmatpush.msra.mxu0 %v71
    %99 = vmatpush.msra.mxu0 %v70
    %100 = vmatpush.msra.mxu0 %v69
    %101 = vmatpush.msra.mxu0 %v68
    %102 = vmatpush.msra.mxu0 %v67
    %103 = vmatmul.f32.gmra.mxu0 %v66
    %v104 = vpop.f32.mrf.mxu0
    %v105 = vadd.f32 %v85, %v104
    %106 = vdwg.mxu0
    %v107 = vmul.f32 %v105, 0.01
    %v108 = vmax.f32 %v105, %v107
    %v109 = vld [vmem:[#allocation7] sm:$0xff]
    %v110 = vld [vmem:[#allocation7 + $0x8] sm:$0xff]
    %v111 = vld [vmem:[#allocation7 + $0x10] sm:$0xff]
    %v112 = vld [vmem:[#allocation7 + $0x18] sm:$0xff]
    %v113 = vld [vmem:[#allocation7 + $0x20] sm:$0xff]
    %v114 = vld [vmem:[#allocation7 + $0x28] sm:$0xff]
    %v115 = vld [vmem:[#allocation7 + $0x30] sm:$0xff]
    %v116 = vld [vmem:[#allocation7 + $0x38] sm:$0xff]
    %v117 = vld [vmem:[#allocation7 + $0x40] sm:$0xff]
    %v118 = vld [vmem:[#allocation7 + $0x48] sm:$0xff]
    %v119 = vld [vmem:[#allocation7 + $0x50] sm:$0xff]
    %v120 = vld [vmem:[#allocation7 + $0x58] sm:$0xff]
    %v121 = vld [vmem:[#allocation7 + $0x60] sm:$0xff]
    %v122 = vld [vmem:[#allocation7 + $0x68] sm:$0xff]
    %v123 = vld [vmem:[#allocation7 + $0x70] sm:$0xff]
    %v124 = vld [vmem:[#allocation7 + $0x78] sm:$0xff]
    %v125 = vld [vmem:[%s4] sm:$0x1]
    %v127 = vperm.slane %v125, 0
    %129 = vmatpush.msra.mxu0 %v124
    %130 = vmatpush.msra.mxu0 %v123
    %131 = vmatpush.msra.mxu0 %v122
    %132 = vmatpush.msra.mxu0 %v121
    %133 = vmatpush.msra.mxu0 %v120
    %134 = vmatpush.msra.mxu0 %v119
    %135 = vmatpush.msra.mxu0 %v118
    %136 = vmatpush.msra.mxu0 %v117
    %137 = vmatpush.msra.mxu0 %v116
    %138 = vmatpush.msra.mxu0 %v115
    %139 = vmatpush.msra.mxu0 %v114
    %140 = vmatpush.msra.mxu0 %v113
    %141 = vmatpush.msra.mxu0 %v112
    %142 = vmatpush.msra.mxu0 %v111
    %143 = vmatpush.msra.mxu0 %v110
    %144 = vmatpush.msra.mxu0 %v109
    %145 = vmatmul.f32.gmra.mxu0 %v108
    %v146 = vpop.f32.mrf.mxu0
    %v147 = vadd.f32 %v127, %v146
    %148 = vdwg.mxu0
    %149 = vst [vmem:[#allocation8] sm:$0xff] %v147
    // Predicated region
    $region34: #{tpu_custom_call.1} parent=1 // pred_check
      _
    $region35: #{tpu_custom_call.1} parent=1 // pred_check_branch
      %151 = sbr.rel (0) target = $region37
    $region36: #{tpu_custom_call.1} parent=1 // pred_region
      %153 = vsyncadd [#allocation4], 0
      %s155 = sshll.u32 [#allocation8], 4
      %s156 = int_to_ptr.vmem [resolvable:$true] %s155
      %s157 = sshll.u32 %s5, 4
      %s158 = int_to_ptr.hbm [resolvable:$true] %s157
      %160 = dma.vmem_to_hbm [thread:$0]  %s156, 128, %s158, [#allocation4]
    $region37: #{tpu_custom_call.1} parent=1 // pred_fallthru
      _
    // Predicated region
    $region38: #{tpu_custom_call.1} parent=1 // pred_check
      _
    $region39: #{tpu_custom_call.1} parent=1 // pred_check_branch
      %162 = sbr.rel (0) target = $region41
    $region40: #{tpu_custom_call.1} parent=1 // pred_region
      %164 = dma.done [#allocation4], 128
    $region41: #{tpu_custom_call.1} parent=1 // pred_fallthru
      _
    %165 = vsyncpa [#allocation3], 1
    %166 = vsyncpa [#allocation6], 1
    %167 = vsyncpa [#allocation4], 1

</llo_original>
